<compile_context>
chip_gen: v7x
topology: tpu7x:2x2x1
jax: 0.10.0
libtpu: 0.0.40
codegen_flags: <defaults>
</compile_context>

<pallas_src>
import functools

import jax
import jax.numpy as jnp
from jax.experimental import pallas as pl
from jax.experimental.pallas import tpu as pltpu

LN_EPS = 1e-5


def _round_up(n, m):
    return ((n + m - 1) // m) * m


def _num_tensorcores():
    """2 TensorCores per chip on v7x, 1 on v5e/v6e.  Best-effort; defaults to 1."""
    try:
        kind = jax.devices()[0].device_kind.lower()
    except Exception:
        return 1
    return 2 if "v7" in kind else 1


def _pick_batch_tile(batch, *, preferred=512, num_cores=1):
    """Batch tile: multiple of 8, capped at `preferred`, split across TensorCores.

    No divisibility requirement -- pl.cdiv + Pallas's ragged last block handle the
    remainder (reads past the end are clipped, tail-row stores are masked)."""
    tb = _round_up(pl.cdiv(batch, max(num_cores, 1)), 8)
    return max(8, min(int(preferred), tb))


def _trigger_mlp_kernel(*refs, hidden_sizes, n_classes):
    """refs = (x, w_hidden..., w_out, param_slab, out). Statics are Python ints."""
    n_hidden = len(hidden_sizes)
    x_ref = refs[0]
    w_refs = refs[1:1 + n_hidden]
    w_out_ref = refs[1 + n_hidden]
    p_ref = refs[2 + n_hidden]
    o_ref = refs[3 + n_hidden]

    p = p_ref[...]                           # (3*L+1, PW) f32, VMEM-resident params
    h = x_ref[...].astype(jnp.bfloat16)      # MXU-native operand dtype

    for li, hs in enumerate(hidden_sizes):
        # Linear (bf16 x bf16 -> f32 accumulate on the MXU)
        y = jnp.dot(h, w_refs[li][...], preferred_element_type=jnp.float32)
        b = p[3 * li + 0:3 * li + 1, :hs]
        g = p[3 * li + 1:3 * li + 2, :hs]
        be = p[3 * li + 2:3 * li + 3, :hs]
        y = y + b
        # Two-pass LayerNorm statistics in f32 (torch semantics, cancellation-safe).
        mu = jnp.mean(y, axis=-1, keepdims=True)
        yc = y - mu
        var = jnp.mean(yc * yc, axis=-1, keepdims=True)
        y = yc * jax.lax.rsqrt(var + LN_EPS)
        y = jnp.maximum(y * g + be, 0.0)      # affine + ReLU (dropout = identity, eval)
        h = y.astype(jnp.bfloat16)

    # Final classifier Linear. 1/temperature is pre-folded into w_out and its bias row.
    # Logits stay 128-lane wide in vregs; only the first n_classes lanes are stored.
    logits = jnp.dot(h, w_out_ref[...], preferred_element_type=jnp.float32)
    row = 3 * n_hidden
    o_ref[...] = logits[:, :n_classes] + p[row:row + 1, :n_classes]


def pack_trigger_params(params, *, temperature=1.0, n_classes=5,
                        hidden_sizes=(256, 128, 64)):
    """One-time (model-load) packing of weights for the fused kernel.

    Hoisted out of the forward path: bf16 casts, (in,out) layout, lane padding of the
    last weight, 1/temperature folding, and the single (3L+1, PW) f32 param slab."""
    hidden_sizes = tuple(int(h) for h in hidden_sizes)
    n_layers = len(hidden_sizes)
    inv_t = 1.0 / float(temperature)
    n_out_pad = _round_up(max(n_classes, 1), 128)     # lane-dense MXU output width
    pw = max(max(hidden_sizes), n_out_pad)            # packed-param slab width

    w_hidden = tuple(params[f"w{i + 1}"].astype(jnp.bfloat16) for i in range(n_layers))
    w_last = params[f"w{n_layers + 1}"].astype(jnp.float32) * inv_t
    w_last = (jnp.zeros((hidden_sizes[-1], n_out_pad), jnp.float32)
              .at[:, :n_classes].set(w_last).astype(jnp.bfloat16))

    # Rows: [b1, g1, be1, b2, g2, be2, b3, g3, be3, b_out*inv_t], padded to pw lanes.
    rows = []
    for i in range(n_layers):
        for name in ("b", "g", "be"):
            v = params[f"{name}{i + 1}"].reshape(-1).astype(jnp.float32)
            rows.append(jnp.pad(v, (0, pw - v.size)))
    b_last = params[f"b{n_layers + 1}"].reshape(-1).astype(jnp.float32) * inv_t
    rows.append(jnp.pad(b_last, (0, pw - b_last.size)))
    p_slab = jnp.stack(rows)                          # (3*L+1, pw) f32

    return dict(w_hidden=w_hidden, w_last=w_last, p_slab=p_slab,
                hidden_sizes=hidden_sizes, n_classes=int(n_classes),
                n_out_pad=int(n_out_pad))


def trigger_classifier_forward(x, packed, *, batch_tile=512):
    """Fused TriggerClassifier MLP forward pass as one Pallas kernel call.

    x: (B, D_in) float32.  packed: output of pack_trigger_params().
    Returns (B, n_classes) float32 logits / temperature."""
    batch, d_in = x.shape
    hidden_sizes = packed["hidden_sizes"]
    n_classes = packed["n_classes"]
    n_out_pad = packed["n_out_pad"]
    w_hidden = packed["w_hidden"]
    w_last = packed["w_last"]
    p_slab = packed["p_slab"]
    n_layers = len(hidden_sizes)

    tb = _pick_batch_tile(batch, preferred=batch_tile, num_cores=_num_tensorcores())
    grid = (pl.cdiv(batch, tb),)

    # Weights / param slab: constant index_map -> DMA'd once, VMEM-resident.
    in_specs = [pl.BlockSpec((tb, d_in), lambda i: (i, 0))]
    in_specs += [pl.BlockSpec(w.shape, lambda i: (0, 0)) for w in w_hidden]
    in_specs += [pl.BlockSpec(w_last.shape, lambda i: (0, 0)),
                 pl.BlockSpec(p_slab.shape, lambda i: (0, 0))]
    # Output written directly at (B, n_classes); last block dim == full array dim.
    out_specs = pl.BlockSpec((tb, n_classes), lambda i: (i, 0))

    dims = (d_in,) + hidden_sizes
    flops = 2 * batch * (sum(dims[i] * dims[i + 1] for i in range(n_layers))
                         + hidden_sizes[-1] * n_out_pad)
    weight_bytes = (sum(int(w.size) * 2 for w in w_hidden)
                    + int(w_last.size) * 2 + int(p_slab.size) * 4)
    bytes_accessed = batch * d_in * 4 + batch * n_classes * 4 + weight_bytes
    cost = pl.CostEstimate(flops=int(flops),
                           transcendentals=int(n_layers * batch),  # rsqrt per row/layer
                           bytes_accessed=int(bytes_accessed))

    kernel = functools.partial(
        _trigger_mlp_kernel, hidden_sizes=hidden_sizes, n_classes=n_classes)

    return pl.pallas_call(
        kernel,
        out_shape=jax.ShapeDtypeStruct((batch, n_classes), jnp.float32),
        grid=grid,
        in_specs=in_specs,
        out_specs=out_specs,
        compiler_params=pltpu.CompilerParams(dimension_semantics=("parallel",)),
        cost_estimate=cost,
    )(x, *w_hidden, w_last, p_slab)


def init_params(key, input_size, hidden_sizes, n_classes):
    """Deterministic synthetic init matching the torch module's layer shapes (f32)."""
    dims = [input_size] + list(hidden_sizes)
    params = {}
    keys = jax.random.split(key, 2 * (len(hidden_sizes) + 1))
    for i in range(len(hidden_sizes)):
        fan_in, fan_out = dims[i], dims[i + 1]
        scale = 1.0 / jnp.sqrt(jnp.float32(fan_in))
        params[f"w{i + 1}"] = jax.random.uniform(
            keys[2 * i], (fan_in, fan_out), jnp.float32, -scale, scale)
        params[f"b{i + 1}"] = jax.random.uniform(
            keys[2 * i + 1], (1, fan_out), jnp.float32, -scale, scale)
        params[f"g{i + 1}"] = jnp.ones((1, fan_out), jnp.float32)
        params[f"be{i + 1}"] = jnp.zeros((1, fan_out), jnp.float32)
    fan_in = hidden_sizes[-1]
    scale = 1.0 / jnp.sqrt(jnp.float32(fan_in))
    nlin = len(hidden_sizes) + 1
    params[f"w{nlin}"] = jax.random.uniform(
        keys[-2], (fan_in, n_classes), jnp.float32, -scale, scale)
    params[f"b{nlin}"] = jax.random.uniform(
        keys[-1], (1, n_classes), jnp.float32, -scale, scale)
    return params


def reference_forward(x, params, *, temperature, hidden_sizes=(256, 128, 64), eps=LN_EPS):
    """Pure-JAX reference (eval-mode torch semantics), mirroring the kernel's bf16
    operand rounding so the comparison isolates kernel correctness.
    NOTE: parity vs the true f32 torch module is looser (deliberate bf16 weight cast)."""
    hp = jax.lax.Precision.HIGHEST

    def rnd(a):  # emulate bf16 MXU operand rounding
        return a.astype(jnp.bfloat16).astype(jnp.float32)

    h = x
    n_layers = len(hidden_sizes)
    for i in range(n_layers):
        y = jnp.dot(rnd(h), rnd(params[f"w{i + 1}"]), precision=hp)
        y = y + params[f"b{i + 1}"].reshape(1, -1)
        mu = y.mean(-1, keepdims=True)
        var = ((y - mu) ** 2).mean(-1, keepdims=True)
        y = (y - mu) * jax.lax.rsqrt(var + eps)
        y = y * params[f"g{i + 1}"].reshape(1, -1) + params[f"be{i + 1}"].reshape(1, -1)
        h = jnp.maximum(y, 0.0)
    logits = jnp.dot(rnd(h), rnd(params[f"w{n_layers + 1}"]), precision=hp)
    logits = logits + params[f"b{n_layers + 1}"].reshape(1, -1)
    return logits / temperature


if __name__ == "__main__":
    input_size = 32
    hidden_sizes = (256, 128, 64)   # module default
    n_classes = 5                   # module default
    temperature = 1.0               # module default
    batch = 8

    key = jax.random.PRNGKey(0)
    pkey, xkey = jax.random.split(key)
    params = init_params(pkey, input_size, list(hidden_sizes), n_classes)
    x = jax.random.normal(xkey, (batch, input_size), jnp.float32)

    # One-time packing (model-load time), then the fused forward.
    packed = pack_trigger_params(params, temperature=temperature,
                                 n_classes=n_classes, hidden_sizes=hidden_sizes)
    packed = jax.block_until_ready(packed)

    logits = trigger_classifier_forward(x, packed)
    logits = jax.block_until_ready(logits)

    ref = reference_forward(x, params, temperature=temperature, hidden_sizes=hidden_sizes)
    assert logits.shape == (batch, n_classes), logits.shape
    max_err = float(jnp.max(jnp.abs(logits - ref)))
    assert jnp.allclose(logits, ref, atol=2e-3, rtol=2e-3), max_err

    print("KERNEL_OK")
</pallas_src>

<mosaic_0001>
module attributes {stable_mosaic.version = 11 : i64} {
  func.func @_trigger_mlp_kernel(%arg0: i32, %arg1: memref<8x32xf32, #tpu.memory_space<vmem>>, %arg2: memref<32x256xbf16, #tpu.memory_space<vmem>>, %arg3: memref<256x128xbf16, #tpu.memory_space<vmem>>, %arg4: memref<128x64xbf16, #tpu.memory_space<vmem>>, %arg5: memref<64x128xbf16, #tpu.memory_space<vmem>>, %arg6: memref<10x256xf32, #tpu.memory_space<vmem>>, %arg7: memref<8x5xf32, #tpu.memory_space<vmem>>) attributes {dimension_semantics = [#tpu.dimension_semantics<parallel>], iteration_bounds = array<i64: 1>, scalar_prefetch = 0 : i64, scratch_operands = 0 : i64, tpu.core_type = #tpu.core_type<tc>, window_params = [{transform_indices = @transform_0, window_bounds = array<i64: 8, 32>}, {pipeline_mode = #tpu.pipeline_mode<synchronous>, transform_indices = @transform_1, window_bounds = array<i64: 32, 256>}, {pipeline_mode = #tpu.pipeline_mode<synchronous>, transform_indices = @transform_2, window_bounds = array<i64: 256, 128>}, {pipeline_mode = #tpu.pipeline_mode<synchronous>, transform_indices = @transform_3, window_bounds = array<i64: 128, 64>}, {pipeline_mode = #tpu.pipeline_mode<synchronous>, transform_indices = @transform_4, window_bounds = array<i64: 64, 128>}, {pipeline_mode = #tpu.pipeline_mode<synchronous>, transform_indices = @transform_5, window_bounds = array<i64: 10, 256>}, {transform_indices = @transform_6, window_bounds = array<i64: 8, 5>}]} {
    %c0 = arith.constant 0 : index
    %c0_0 = arith.constant 0 : index
    %0 = vector.load %arg6[%c0, %c0_0] : memref<10x256xf32, #tpu.memory_space<vmem>>, vector<10x256xf32>
    %c0_1 = arith.constant 0 : index
    %c0_2 = arith.constant 0 : index
    %1 = vector.load %arg1[%c0_1, %c0_2] : memref<8x32xf32, #tpu.memory_space<vmem>>, vector<8x32xf32>
    %2 = arith.truncf %1 : vector<8x32xf32> to vector<8x32xbf16>
    %c0_3 = arith.constant 0 : index
    %c0_4 = arith.constant 0 : index
    %3 = vector.load %arg2[%c0_3, %c0_4] : memref<32x256xbf16, #tpu.memory_space<vmem>>, vector<32x256xbf16>
    %cst = arith.constant dense<0.000000e+00> : vector<8x256xf32>
    %4 = tpu.matmul %2, %3, %cst {dimension_numbers = #tpu.dot_dimension_numbers<[1], [0], [0], [1], [0, 0, 1, 1], [], []>} : vector<8x32xbf16>, vector<32x256xbf16>, vector<8x256xf32> -> vector<8x256xf32>
    %5 = vector.extract_strided_slice %0 {offsets = [0, 0], sizes = [1, 256], strides = [1, 1]} : vector<10x256xf32> to vector<1x256xf32>
    %6 = vector.extract_strided_slice %0 {offsets = [1, 0], sizes = [1, 256], strides = [1, 1]} : vector<10x256xf32> to vector<1x256xf32>
    %7 = vector.extract_strided_slice %0 {offsets = [2, 0], sizes = [1, 256], strides = [1, 1]} : vector<10x256xf32> to vector<1x256xf32>
    %8 = vector.broadcast %5 : vector<1x256xf32> to vector<8x256xf32>
    %9 = arith.addf %4, %8 : vector<8x256xf32>
    %cst_5 = arith.constant dense<0.000000e+00> : vector<8xf32>
    %10 = vector.multi_reduction <add>, %9, %cst_5 [1] : vector<8x256xf32> to vector<8xf32>
    %11 = vector.shape_cast %10 : vector<8xf32> to vector<8x1xf32>
    %cst_6 = arith.constant 2.560000e+02 : f32
    %12 = vector.broadcast %cst_6 : f32 to vector<8x1xf32>
    %13 = arith.divf %11, %12 : vector<8x1xf32>
    %14 = vector.broadcast %13 : vector<8x1xf32> to vector<8x256xf32>
    %15 = arith.subf %9, %14 : vector<8x256xf32>
    %16 = arith.mulf %15, %15 : vector<8x256xf32>
    %cst_7 = arith.constant dense<0.000000e+00> : vector<8xf32>
    %17 = vector.multi_reduction <add>, %16, %cst_7 [1] : vector<8x256xf32> to vector<8xf32>
    %18 = vector.shape_cast %17 : vector<8xf32> to vector<8x1xf32>
    %cst_8 = arith.constant 2.560000e+02 : f32
    %19 = vector.broadcast %cst_8 : f32 to vector<8x1xf32>
    %20 = arith.divf %18, %19 : vector<8x1xf32>
    %cst_9 = arith.constant 9.99999974E-6 : f32
    %21 = vector.broadcast %cst_9 : f32 to vector<8x1xf32>
    %22 = arith.addf %20, %21 : vector<8x1xf32>
    %23 = math.rsqrt %22 : vector<8x1xf32>
    %24 = vector.broadcast %23 : vector<8x1xf32> to vector<8x256xf32>
    %25 = arith.mulf %15, %24 : vector<8x256xf32>
    %26 = vector.broadcast %6 : vector<1x256xf32> to vector<8x256xf32>
    %27 = arith.mulf %25, %26 : vector<8x256xf32>
    %28 = vector.broadcast %7 : vector<1x256xf32> to vector<8x256xf32>
    %29 = arith.addf %27, %28 : vector<8x256xf32>
    %cst_10 = arith.constant 0.000000e+00 : f32
    %30 = vector.broadcast %cst_10 : f32 to vector<8x256xf32>
    %31 = arith.maximumf %29, %30 : vector<8x256xf32>
    %32 = arith.truncf %31 : vector<8x256xf32> to vector<8x256xbf16>
    %c0_11 = arith.constant 0 : index
    %c0_12 = arith.constant 0 : index
    %33 = vector.load %arg3[%c0_11, %c0_12] : memref<256x128xbf16, #tpu.memory_space<vmem>>, vector<256x128xbf16>
    %cst_13 = arith.constant dense<0.000000e+00> : vector<8x128xf32>
    %34 = tpu.matmul %32, %33, %cst_13 {dimension_numbers = #tpu.dot_dimension_numbers<[1], [0], [0], [1], [0, 0, 1, 1], [], []>} : vector<8x256xbf16>, vector<256x128xbf16>, vector<8x128xf32> -> vector<8x128xf32>
    %35 = vector.extract_strided_slice %0 {offsets = [3, 0], sizes = [1, 128], strides = [1, 1]} : vector<10x256xf32> to vector<1x128xf32>
    %36 = vector.extract_strided_slice %0 {offsets = [4, 0], sizes = [1, 128], strides = [1, 1]} : vector<10x256xf32> to vector<1x128xf32>
    %37 = vector.extract_strided_slice %0 {offsets = [5, 0], sizes = [1, 128], strides = [1, 1]} : vector<10x256xf32> to vector<1x128xf32>
    %38 = vector.broadcast %35 : vector<1x128xf32> to vector<8x128xf32>
    %39 = arith.addf %34, %38 : vector<8x128xf32>
    %cst_14 = arith.constant dense<0.000000e+00> : vector<8xf32>
    %40 = vector.multi_reduction <add>, %39, %cst_14 [1] : vector<8x128xf32> to vector<8xf32>
    %41 = vector.shape_cast %40 : vector<8xf32> to vector<8x1xf32>
    %cst_15 = arith.constant 1.280000e+02 : f32
    %42 = vector.broadcast %cst_15 : f32 to vector<8x1xf32>
    %43 = arith.divf %41, %42 : vector<8x1xf32>
    %44 = vector.broadcast %43 : vector<8x1xf32> to vector<8x128xf32>
    %45 = arith.subf %39, %44 : vector<8x128xf32>
    %46 = arith.mulf %45, %45 : vector<8x128xf32>
    %cst_16 = arith.constant dense<0.000000e+00> : vector<8xf32>
    %47 = vector.multi_reduction <add>, %46, %cst_16 [1] : vector<8x128xf32> to vector<8xf32>
    %48 = vector.shape_cast %47 : vector<8xf32> to vector<8x1xf32>
    %cst_17 = arith.constant 1.280000e+02 : f32
    %49 = vector.broadcast %cst_17 : f32 to vector<8x1xf32>
    %50 = arith.divf %48, %49 : vector<8x1xf32>
    %cst_18 = arith.constant 9.99999974E-6 : f32
    %51 = vector.broadcast %cst_18 : f32 to vector<8x1xf32>
    %52 = arith.addf %50, %51 : vector<8x1xf32>
    %53 = math.rsqrt %52 : vector<8x1xf32>
    %54 = vector.broadcast %53 : vector<8x1xf32> to vector<8x128xf32>
    %55 = arith.mulf %45, %54 : vector<8x128xf32>
    %56 = vector.broadcast %36 : vector<1x128xf32> to vector<8x128xf32>
    %57 = arith.mulf %55, %56 : vector<8x128xf32>
    %58 = vector.broadcast %37 : vector<1x128xf32> to vector<8x128xf32>
    %59 = arith.addf %57, %58 : vector<8x128xf32>
    %cst_19 = arith.constant 0.000000e+00 : f32
    %60 = vector.broadcast %cst_19 : f32 to vector<8x128xf32>
    %61 = arith.maximumf %59, %60 : vector<8x128xf32>
    %62 = arith.truncf %61 : vector<8x128xf32> to vector<8x128xbf16>
    %c0_20 = arith.constant 0 : index
    %c0_21 = arith.constant 0 : index
    %63 = vector.load %arg4[%c0_20, %c0_21] : memref<128x64xbf16, #tpu.memory_space<vmem>>, vector<128x64xbf16>
    %cst_22 = arith.constant dense<0.000000e+00> : vector<8x64xf32>
    %64 = tpu.matmul %62, %63, %cst_22 {dimension_numbers = #tpu.dot_dimension_numbers<[1], [0], [0], [1], [0, 0, 1, 1], [], []>} : vector<8x128xbf16>, vector<128x64xbf16>, vector<8x64xf32> -> vector<8x64xf32>
    %65 = vector.extract_strided_slice %0 {offsets = [6, 0], sizes = [1, 64], strides = [1, 1]} : vector<10x256xf32> to vector<1x64xf32>
    %66 = vector.extract_strided_slice %0 {offsets = [7, 0], sizes = [1, 64], strides = [1, 1]} : vector<10x256xf32> to vector<1x64xf32>
    %67 = vector.extract_strided_slice %0 {offsets = [8, 0], sizes = [1, 64], strides = [1, 1]} : vector<10x256xf32> to vector<1x64xf32>
    %68 = vector.broadcast %65 : vector<1x64xf32> to vector<8x64xf32>
    %69 = arith.addf %64, %68 : vector<8x64xf32>
    %cst_23 = arith.constant dense<0.000000e+00> : vector<8xf32>
    %70 = vector.multi_reduction <add>, %69, %cst_23 [1] : vector<8x64xf32> to vector<8xf32>
    %71 = vector.shape_cast %70 : vector<8xf32> to vector<8x1xf32>
    %cst_24 = arith.constant 6.400000e+01 : f32
    %72 = vector.broadcast %cst_24 : f32 to vector<8x1xf32>
    %73 = arith.divf %71, %72 : vector<8x1xf32>
    %74 = vector.broadcast %73 : vector<8x1xf32> to vector<8x64xf32>
    %75 = arith.subf %69, %74 : vector<8x64xf32>
    %76 = arith.mulf %75, %75 : vector<8x64xf32>
    %cst_25 = arith.constant dense<0.000000e+00> : vector<8xf32>
    %77 = vector.multi_reduction <add>, %76, %cst_25 [1] : vector<8x64xf32> to vector<8xf32>
    %78 = vector.shape_cast %77 : vector<8xf32> to vector<8x1xf32>
    %cst_26 = arith.constant 6.400000e+01 : f32
    %79 = vector.broadcast %cst_26 : f32 to vector<8x1xf32>
    %80 = arith.divf %78, %79 : vector<8x1xf32>
    %cst_27 = arith.constant 9.99999974E-6 : f32
    %81 = vector.broadcast %cst_27 : f32 to vector<8x1xf32>
    %82 = arith.addf %80, %81 : vector<8x1xf32>
    %83 = math.rsqrt %82 : vector<8x1xf32>
    %84 = vector.broadcast %83 : vector<8x1xf32> to vector<8x64xf32>
    %85 = arith.mulf %75, %84 : vector<8x64xf32>
    %86 = vector.broadcast %66 : vector<1x64xf32> to vector<8x64xf32>
    %87 = arith.mulf %85, %86 : vector<8x64xf32>
    %88 = vector.broadcast %67 : vector<1x64xf32> to vector<8x64xf32>
    %89 = arith.addf %87, %88 : vector<8x64xf32>
    %cst_28 = arith.constant 0.000000e+00 : f32
    %90 = vector.broadcast %cst_28 : f32 to vector<8x64xf32>
    %91 = arith.maximumf %89, %90 : vector<8x64xf32>
    %92 = arith.truncf %91 : vector<8x64xf32> to vector<8x64xbf16>
    %c0_29 = arith.constant 0 : index
    %c0_30 = arith.constant 0 : index
    %93 = vector.load %arg5[%c0_29, %c0_30] : memref<64x128xbf16, #tpu.memory_space<vmem>>, vector<64x128xbf16>
    %cst_31 = arith.constant dense<0.000000e+00> : vector<8x128xf32>
    %94 = tpu.matmul %92, %93, %cst_31 {dimension_numbers = #tpu.dot_dimension_numbers<[1], [0], [0], [1], [0, 0, 1, 1], [], []>} : vector<8x64xbf16>, vector<64x128xbf16>, vector<8x128xf32> -> vector<8x128xf32>
    %95 = vector.extract_strided_slice %94 {offsets = [0, 0], sizes = [8, 5], strides = [1, 1]} : vector<8x128xf32> to vector<8x5xf32>
    %96 = vector.extract_strided_slice %0 {offsets = [9, 0], sizes = [1, 5], strides = [1, 1]} : vector<10x256xf32> to vector<1x5xf32>
    %97 = vector.broadcast %96 : vector<1x5xf32> to vector<8x5xf32>
    %98 = arith.addf %95, %97 : vector<8x5xf32>
    %c0_32 = arith.constant 0 : index
    %c0_33 = arith.constant 0 : index
    %99 = vector.load %arg7[%c0_32, %c0_33] : memref<8x5xf32, #tpu.memory_space<vmem>>, vector<8x5xf32>
    tpu.vector_store %arg7[%c0_32, %c0_33], %98 {strides = array<i32>} : memref<8x5xf32, #tpu.memory_space<vmem>>, vector<8x5xf32>,
    return
  }
  func.func @transform_0(%arg0: i32) -> (i32, i32) {
    %c0_i32 = arith.constant 0 : i32
    %c0_i32_0 = arith.constant 0 : i32
    return %arg0, %c0_i32 : i32, i32
  }
  func.func @transform_1(%arg0: i32) -> (i32, i32) {
    %c0_i32 = arith.constant 0 : i32
    %c0_i32_0 = arith.constant 0 : i32
    %c0_i32_1 = arith.constant 0 : i32
    return %c0_i32, %c0_i32_0 : i32, i32
  }
  func.func @transform_2(%arg0: i32) -> (i32, i32) {
    %c0_i32 = arith.constant 0 : i32
    %c0_i32_0 = arith.constant 0 : i32
    %c0_i32_1 = arith.constant 0 : i32
    return %c0_i32, %c0_i32_0 : i32, i32
  }
  func.func @transform_3(%arg0: i32) -> (i32, i32) {
    %c0_i32 = arith.constant 0 : i32
    %c0_i32_0 = arith.constant 0 : i32
    %c0_i32_1 = arith.constant 0 : i32
    return %c0_i32, %c0_i32_0 : i32, i32
  }
  func.func @transform_4(%arg0: i32) -> (i32, i32) {
    %c0_i32 = arith.constant 0 : i32
    %c0_i32_0 = arith.constant 0 : i32
    %c0_i32_1 = arith.constant 0 : i32
    return %c0_i32, %c0_i32_0 : i32, i32
  }
  func.func @transform_5(%arg0: i32) -> (i32, i32) {
    %c0_i32 = arith.constant 0 : i32
    %c0_i32_0 = arith.constant 0 : i32
    %c0_i32_1 = arith.constant 0 : i32
    return %c0_i32, %c0_i32_0 : i32, i32
  }
  func.func @transform_6(%arg0: i32) -> (i32, i32) {
    %c0_i32 = arith.constant 0 : i32
    %c0_i32_0 = arith.constant 0 : i32
    return %arg0, %c0_i32 : i32, i32
  }
}

</mosaic_0001>

<llo_original>
// kernel: tpu_custom_call.1
$region0: #{tpu_custom_call.1}
  #allocation0 [shape = 'u32[]', space=smem, size = 0x4, offset = 0x4, fixed_abs, tag = 'smem constant byte address 0x4 - core index']
  #allocation1 [shape = 'u32[144,128]{1,0:T(1,128)}', space=vmem, size = 0x12000, scoped, tag = 'internal scratch']
  %s0 = inlined_call_operand.hbm [shape: f32[8,32], index: 0, kind: input, shape index: {}]
  %s1 = inlined_call_operand.vmem [shape: bf16[32,256], index: 1, kind: input, shape index: {}]
  %s2 = inlined_call_operand.hbm [shape: bf16[256,128], index: 2, kind: input, shape index: {}]
  %s3 = inlined_call_operand.vmem [shape: bf16[128,64], index: 3, kind: input, shape index: {}]
  %s4 = inlined_call_operand.vmem [shape: bf16[64,128], index: 4, kind: input, shape index: {}]
  %s5 = inlined_call_operand.vmem [shape: f32[10,256], index: 5, kind: input, shape index: {}]
  %s6 = inlined_call_operand.hbm [shape: f32[8,5], index: 6, kind: output, shape index: {}]
  %s7 = sld [smem:[#allocation0]]
  $region42: #{tpu_custom_call.1} parent=0
    _
  %s9 = ssub.s32 1, %s7
  %s10 = scalar_select 0, %s9, %s7
  $region1: #{tpu_custom_call.1} parent=0
    #allocation2 [shape = 'u8[4096]{0}', space=vmem, size = 0x1000, scoped, tag = 'input window, operand 0, single buffered']
    #allocation3 [shape = 's32[1]{0}', space=sflag, size = 0x4, scoped, tag = 'scoped memory for tpu_custom_call.1']
    #allocation4 [shape = 's32[1]{0}', space=sflag, size = 0x4, scoped, tag = 'scoped memory for tpu_custom_call.1']
    #allocation5 [shape = 'u8[65536]{0}', space=vmem, size = 0x10000, scoped, tag = 'input window, operand 2, single buffered']
    #allocation6 [shape = 's32[1]{0}', space=sflag, size = 0x4, scoped, tag = 'scoped memory for tpu_custom_call.1']
    #allocation7 [shape = 'u8[4096]{0}', space=vmem, size = 0x1000, scoped, tag = 'output window, operand 0, single buffered']
    %11 = vsyncpa [#allocation3], 0
    %12 = vsyncpa [#allocation6], 0
    %13 = vsyncpa [#allocation4], 0
    // Predicated region
    $region2: #{tpu_custom_call.1} parent=1 // pred_check
      _
    $region3: #{tpu_custom_call.1} parent=1 // pred_check_branch
      %15 = sbr.rel (0) target = $region5
    $region4: #{tpu_custom_call.1} parent=1 // pred_region
      %s17 = ssub.s32 128, 128
      %18 = vsyncadd [#allocation3], %s17
      %s20 = sshll.u32 [#allocation2], 4
      %s21 = int_to_ptr.vmem [resolvable:$true] %s20
      %23 = dma.hbm_to_vmem [thread:$0]  %s0, 128, %s21, [#allocation3]
    $region5: #{tpu_custom_call.1} parent=1 // pred_fallthru
      _
    // Predicated region
    $region6: #{tpu_custom_call.1} parent=1 // pred_check
      _
    $region7: #{tpu_custom_call.1} parent=1 // pred_check_branch
      %25 = sbr.rel (0) target = $region9
    $region8: #{tpu_custom_call.1} parent=1 // pred_region
      _
    $region9: #{tpu_custom_call.1} parent=1 // pred_fallthru
      _
    // Predicated region
    $region10: #{tpu_custom_call.1} parent=1 // pred_check
      _
    $region11: #{tpu_custom_call.1} parent=1 // pred_check_branch
      %27 = sbr.rel (0) target = $region13
    $region12: #{tpu_custom_call.1} parent=1 // pred_region
      %s29 = ssub.s32 2048, 2048
      %30 = vsyncadd [#allocation6], %s29
      %s31 = sshll.u32 [#allocation5], 4
      %s32 = int_to_ptr.vmem [resolvable:$true] %s31
      %37 = dma.hbm_to_vmem [thread:$0]  %s2, 2048, %s32, [#allocation6], 64, 64, 4
    $region13: #{tpu_custom_call.1} parent=1 // pred_fallthru
      _
    // Predicated region
    $region14: #{tpu_custom_call.1} parent=1 // pred_check
      _
    $region15: #{tpu_custom_call.1} parent=1 // pred_check_branch
      %39 = sbr.rel (0) target = $region17
    $region16: #{tpu_custom_call.1} parent=1 // pred_region
      _
    $region17: #{tpu_custom_call.1} parent=1 // pred_fallthru
      _
    // Predicated region
    $region18: #{tpu_custom_call.1} parent=1 // pred_check
      _
    $region19: #{tpu_custom_call.1} parent=1 // pred_check_branch
      %41 = sbr.rel (0) target = $region21
    $region20: #{tpu_custom_call.1} parent=1 // pred_region
      _
    $region21: #{tpu_custom_call.1} parent=1 // pred_fallthru
      _
    // Predicated region
    $region22: #{tpu_custom_call.1} parent=1 // pred_check
      _
    $region23: #{tpu_custom_call.1} parent=1 // pred_check_branch
      %43 = sbr.rel (0) target = $region25
    $region24: #{tpu_custom_call.1} parent=1 // pred_region
      _
    $region25: #{tpu_custom_call.1} parent=1 // pred_fallthru
      _
    // Predicated region
    $region26: #{tpu_custom_call.1} parent=1 // pred_check
      _
    $region27: #{tpu_custom_call.1} parent=1 // pred_check_branch
      %45 = sbr.rel (0) target = $region29
    $region28: #{tpu_custom_call.1} parent=1 // pred_region
      %46 = dma.done [#allocation3], 128
    $region29: #{tpu_custom_call.1} parent=1 // pred_fallthru
      _
    // Predicated region
    $region30: #{tpu_custom_call.1} parent=1 // pred_check
      _
    $region31: #{tpu_custom_call.1} parent=1 // pred_check_branch
      %48 = sbr.rel (0) target = $region33
    $region32: #{tpu_custom_call.1} parent=1 // pred_region
      %49 = dma.done [#allocation6], 2048
    $region33: #{tpu_custom_call.1} parent=1 // pred_fallthru
      _
    %v51 = vld [vmem:[%s5] sm:$0xff]
    %v52 = vld [vmem:[%s5 + $0x8] sm:$0xff]
    %v53 = vld [vmem:[%s5 + $0x10] sm:$0x3]
    %v54 = vld [vmem:[#allocation2] sm:$0xff]
    %v55 = vpack.c.bf16 %v54, %v54
    %v56 = vld [vmem:[%s1] sm:$0xff]
    %v57 = vld [vmem:[%s1 + $0x8] sm:$0xff]
    %v58 = vld [vmem:[%s1 + $0x10] sm:$0xff]
    %v59 = vld [vmem:[%s1 + $0x18] sm:$0xff]
    %v60 = vlaneseq
    %v61 = vshrl.u32 %v60, 7
    %v62 = vsub.s32 0, %v61
    %v63 = vrot.slane %v51, %v62
    %v64 = vlaneseq
    %v65 = vshrl.u32 %v64, 7
    %v66 = vsub.s32 0, %v65
    %v67 = vrot.slane %v52, %v66
    %v72 = vunpack.c.l.b16 %v56
    %v73 = vunpack.c.h.b16 %v56
    %v74 = vunpack.c.l.b16 %v57
    %v75 = vunpack.c.h.b16 %v57
    %v76 = vunpack.c.l.b16 %v58
    %v77 = vunpack.c.h.b16 %v58
    %v78 = vunpack.c.l.b16 %v59
    %v79 = vunpack.c.h.b16 %v59
    %v80 = vpack.c.b16 %v74, %v72
    %v81 = vpack.c.b16 %v75, %v73
    %v82 = vpack.c.b16 %v78, %v76
    %v83 = vpack.c.b16 %v79, %v77
    %vm88 = vcmask 261120
    %v90 = vsel %vm88, %v55, 0
    %92 = vmatprep.subr.bf16.mxu0 %v81
    %93 = vmatpush1.bf16.msra.mxu0 %v80
    %94 = vmatprep.subr.bf16.mxu0 %v83
    %95 = vmatpush1.bf16.msra.mxu0 %v82
    %96 = vmatprep.subr.bf16.mxu0 0
    %97 = vmatpush1.bf16.msra.mxu0 0
    %98 = vmatprep.subr.bf16.mxu0 0
    %99 = vmatpush1.bf16.msra.mxu0 0
    %100 = vmatprep.subr.bf16.mxu0 0
    %101 = vmatpush1.bf16.msra.mxu0 0
    %102 = vmatprep.subr.bf16.mxu0 0
    %103 = vmatpush1.bf16.msra.mxu0 0
    %104 = vmatprep.subr.bf16.mxu0 0
    %105 = vmatpush1.bf16.msra.mxu0 0
    %106 = vmatprep.subr.bf16.mxu0 0
    %107 = vmatpush1.bf16.msra.mxu0 0
    %108 = vmatprep.subr.bf16.mxu0 0
    %109 = vmatpush1.bf16.msra.mxu0 0
    %110 = vmatprep.subr.bf16.mxu0 0
    %111 = vmatpush1.bf16.msra.mxu0 0
    %112 = vmatprep.subr.bf16.mxu0 0
    %113 = vmatpush1.bf16.msra.mxu0 0
    %114 = vmatprep.subr.bf16.mxu0 0
    %115 = vmatpush1.bf16.msra.mxu0 0
    %116 = vmatprep.subr.bf16.mxu0 0
    %117 = vmatpush1.bf16.msra.mxu0 0
    %118 = vmatprep.subr.bf16.mxu0 0
    %119 = vmatpush1.bf16.msra.mxu0 0
    %120 = vmatprep.subr.bf16.mxu0 0
    %121 = vmatpush1.bf16.msra.mxu0 0
    %122 = vmatprep.subr.bf16.mxu0 0
    %123 = vmatpush1.bf16.msra.mxu0 0
    %124 = vmatprep.mubr.bf16.mxu0 0
    %125 = vmatmul.mubr.bf16.gmra.mrb[0].mxu0 %v90
    %v126 = vpop.f32.mrb[0].mxu0
    %v127 = vadd.f32 %v63, %v126
    %v128 = vpop.f32.mrb[0].mxu0
    %v129 = vadd.f32 %v67, %v128
    %v130 = vpop.f32.mrb[0].mxu0
    %v131 = vpop.f32.mrb[0].mxu0
    %132 = vdwg.mxu0
    %v133 = vadd.f32 %v127, %v129
    %134 = vadd.xlane.f32.xlu0 %v133
    %v135 = vpop.xlane.xlu0 %134
    %v136 = vrcp.pop 256.0
    %v137 = vmul.f32 %v135, %v136
    %v138 = vsub.f32 %v127, %v137
    %v139 = vsub.f32 %v129, %v137
    %v140 = vmul.f32 %v138, %v138
    %v141 = vmul.f32 %v139, %v139
    %v142 = vadd.f32 %v140, %v141
    %143 = vadd.xlane.f32.xlu0 %v142
    %v144 = vpop.xlane.xlu0 %143
    %v145 = vmul.f32 %v144, %v136
    %v146 = vadd.f32 %v145, 1e-05
    %v147 = vrsqrt.pop %v146
    %v148 = vmul.f32 %v138, %v147
    %v149 = vmul.f32 %v139, %v147
    %v150 = vlaneseq
    %v151 = vshrl.u32 %v150, 7
    %v152 = vsub.s32 1, %v151
    %v153 = vrot.slane %v51, %v152
    %v154 = vlaneseq
    %v155 = vshrl.u32 %v154, 7
    %v156 = vsub.s32 1, %v155
    %v157 = vrot.slane %v52, %v156
    %v158 = vmul.f32 %v148, %v153
    %v159 = vmul.f32 %v149, %v157
    %v160 = vlaneseq
    %v161 = vshrl.u32 %v160, 7
    %v162 = vsub.s32 2, %v161
    %v163 = vrot.slane %v51, %v162
    %v164 = vlaneseq
    %v165 = vshrl.u32 %v164, 7
    %v166 = vsub.s32 2, %v165
    %v167 = vrot.slane %v52, %v166
    %v168 = vadd.f32 %v158, %v163
    %v169 = vadd.f32 %v159, %v167
    %v170 = vmax.f32 %v168, 0.0
    %v171 = vmax.f32 %v169, 0.0
    %v172 = vpack.c.bf16 %v170, %v170
    %v173 = vpack.c.bf16 %v171, %v171
    %v174 = vld [vmem:[#allocation5] sm:$0xf]
    %v175 = vld [vmem:[#allocation5 + $0x4] sm:$0xf]
    %v176 = vld [vmem:[#allocation5 + $0x8] sm:$0xf]
    %v177 = vld [vmem:[#allocation5 + $0xc] sm:$0xf]
    %v178 = vld [vmem:[#allocation5 + $0x10] sm:$0xf]
    %v179 = vld [vmem:[#allocation5 + $0x14] sm:$0xf]
    %v180 = vld [vmem:[#allocation5 + $0x18] sm:$0xf]
    %v181 = vld [vmem:[#allocation5 + $0x1c] sm:$0xf]
    %v182 = vld [vmem:[#allocation5 + $0x20] sm:$0xf]
    %v183 = vld [vmem:[#allocation5 + $0x24] sm:$0xf]
    %v184 = vld [vmem:[#allocation5 + $0x28] sm:$0xf]
    %v185 = vld [vmem:[#allocation5 + $0x2c] sm:$0xf]
    %v186 = vld [vmem:[#allocation5 + $0x30] sm:$0xf]
    %v187 = vld [vmem:[#allocation5 + $0x34] sm:$0xf]
    %v188 = vld [vmem:[#allocation5 + $0x38] sm:$0xf]
    %v189 = vld [vmem:[#allocation5 + $0x3c] sm:$0xf]
    %v190 = vld [vmem:[#allocation5 + $0x40] sm:$0xf]
    %v191 = vld [vmem:[#allocation5 + $0x44] sm:$0xf]
    %v192 = vld [vmem:[#allocation5 + $0x48] sm:$0xf]
    %v193 = vld [vmem:[#allocation5 + $0x4c] sm:$0xf]
    %v194 = vld [vmem:[#allocation5 + $0x50] sm:$0xf]
    %v195 = vld [vmem:[#allocation5 + $0x54] sm:$0xf]
    %v196 = vld [vmem:[#allocation5 + $0x58] sm:$0xf]
    %v197 = vld [vmem:[#allocation5 + $0x5c] sm:$0xf]
    %v198 = vld [vmem:[#allocation5 + $0x60] sm:$0xf]
    %v199 = vld [vmem:[#allocation5 + $0x64] sm:$0xf]
    %v200 = vld [vmem:[#allocation5 + $0x68] sm:$0xf]
    %v201 = vld [vmem:[#allocation5 + $0x6c] sm:$0xf]
    %v202 = vld [vmem:[#allocation5 + $0x70] sm:$0xf]
    %v203 = vld [vmem:[#allocation5 + $0x74] sm:$0xf]
    %v204 = vld [vmem:[#allocation5 + $0x78] sm:$0xf]
    %v205 = vld [vmem:[#allocation5 + $0x7c] sm:$0xf]
    %v206 = vlaneseq
    %v207 = vshrl.u32 %v206, 7
    %v208 = vsub.s32 3, %v207
    %v209 = vrot.slane %v51, %v208
    %v242 = vunpack.c.l.b16 %v174
    %v243 = vunpack.c.l.b16 %v175
    %v244 = vunpack.c.l.b16 %v176
    %v245 = vunpack.c.l.b16 %v177
    %v246 = vunpack.c.l.b16 %v178
    %v247 = vunpack.c.l.b16 %v179
    %v248 = vunpack.c.l.b16 %v180
    %v249 = vunpack.c.l.b16 %v181
    %v250 = vunpack.c.l.b16 %v182
    %v251 = vunpack.c.l.b16 %v183
    %v252 = vunpack.c.l.b16 %v184
    %v253 = vunpack.c.l.b16 %v185
    %v254 = vunpack.c.l.b16 %v186
    %v255 = vunpack.c.l.b16 %v187
    %v256 = vunpack.c.l.b16 %v188
    %v257 = vunpack.c.l.b16 %v189
    %v258 = vunpack.c.l.b16 %v190
    %v259 = vunpack.c.l.b16 %v191
    %v260 = vunpack.c.l.b16 %v192
    %v261 = vunpack.c.l.b16 %v193
    %v262 = vunpack.c.l.b16 %v194
    %v263 = vunpack.c.l.b16 %v195
    %v264 = vunpack.c.l.b16 %v196
    %v265 = vunpack.c.l.b16 %v197
    %v266 = vunpack.c.l.b16 %v198
    %v267 = vunpack.c.l.b16 %v199
    %v268 = vunpack.c.l.b16 %v200
    %v269 = vunpack.c.l.b16 %v201
    %v270 = vunpack.c.l.b16 %v202
    %v271 = vunpack.c.l.b16 %v203
    %v272 = vunpack.c.l.b16 %v204
    %v273 = vunpack.c.l.b16 %v205
    %v274 = vpack.c.b16 %v243, %v242
    %v275 = vpack.c.b16 %v245, %v244
    %v276 = vpack.c.b16 %v247, %v246
    %v277 = vpack.c.b16 %v249, %v248
    %v278 = vpack.c.b16 %v251, %v250
    %v279 = vpack.c.b16 %v253, %v252
    %v280 = vpack.c.b16 %v255, %v254
    %v281 = vpack.c.b16 %v257, %v256
    %v282 = vpack.c.b16 %v259, %v258
    %v283 = vpack.c.b16 %v261, %v260
    %v284 = vpack.c.b16 %v263, %v262
    %v285 = vpack.c.b16 %v265, %v264
    %v286 = vpack.c.b16 %v267, %v266
    %v287 = vpack.c.b16 %v269, %v268
    %v288 = vpack.c.b16 %v271, %v270
    %v289 = vpack.c.b16 %v273, %v272
    %306 = vmatprep.subr.bf16.mxu0 0
    %307 = vmatpush1.bf16.msra.mxu0 %v274
    %308 = vmatprep.subr.bf16.mxu0 0
    %309 = vmatpush1.bf16.msra.mxu0 %v275
    %310 = vmatprep.subr.bf16.mxu0 0
    %311 = vmatpush1.bf16.msra.mxu0 %v276
    %312 = vmatprep.subr.bf16.mxu0 0
    %313 = vmatpush1.bf16.msra.mxu0 %v277
    %314 = vmatprep.subr.bf16.mxu0 0
    %315 = vmatpush1.bf16.msra.mxu0 %v278
    %316 = vmatprep.subr.bf16.mxu0 0
    %317 = vmatpush1.bf16.msra.mxu0 %v279
    %318 = vmatprep.subr.bf16.mxu0 0
    %319 = vmatpush1.bf16.msra.mxu0 %v280
    %320 = vmatprep.subr.bf16.mxu0 0
    %321 = vmatpush1.bf16.msra.mxu0 %v281
    %322 = vmatprep.subr.bf16.mxu0 0
    %323 = vmatpush1.bf16.msra.mxu0 %v282
    %324 = vmatprep.subr.bf16.mxu0 0
    %325 = vmatpush1.bf16.msra.mxu0 %v283
    %326 = vmatprep.subr.bf16.mxu0 0
    %327 = vmatpush1.bf16.msra.mxu0 %v284
    %328 = vmatprep.subr.bf16.mxu0 0
    %329 = vmatpush1.bf16.msra.mxu0 %v285
    %330 = vmatprep.subr.bf16.mxu0 0
    %331 = vmatpush1.bf16.msra.mxu0 %v286
    %332 = vmatprep.subr.bf16.mxu0 0
    %333 = vmatpush1.bf16.msra.mxu0 %v287
    %334 = vmatprep.subr.bf16.mxu0 0
    %335 = vmatpush1.bf16.msra.mxu0 %v288
    %336 = vmatprep.subr.bf16.mxu0 0
    %337 = vmatpush1.bf16.msra.mxu0 %v289
    %338 = vmatprep.mubr.bf16.mxu0 %v173
    %339 = vmatmul.mubr.bf16.gmra.mrb[0].mxu0 %v172
    %v340 = vpop.f32.mrb[0].mxu0
    %v341 = vadd.f32 %v209, %v340
    %v342 = vpop.f32.mrb[0].mxu0
    %v343 = vpop.f32.mrb[0].mxu0
    %v344 = vpop.f32.mrb[0].mxu0
    %345 = vdwg.mxu0
    %346 = vadd.xlane.f32.xlu0 %v341
    %v347 = vpop.xlane.xlu0 %346
    %v348 = vrcp.pop 128.0
    %v349 = vmul.f32 %v347, %v348
    %v350 = vsub.f32 %v341, %v349
    %v351 = vmul.f32 %v350, %v350
    %352 = vadd.xlane.f32.xlu0 %v351
    %v353 = vpop.xlane.xlu0 %352
    %v354 = vmul.f32 %v353, %v348
    %v355 = vadd.f32 %v354, 1e-05
    %v356 = vrsqrt.pop %v355
    %v357 = vmul.f32 %v350, %v356
    %v358 = vlaneseq
    %v359 = vshrl.u32 %v358, 7
    %v360 = vsub.s32 4, %v359
    %v361 = vrot.slane %v51, %v360
    %v362 = vmul.f32 %v357, %v361
    %v363 = vlaneseq
    %v364 = vshrl.u32 %v363, 7
    %v365 = vsub.s32 5, %v364
    %v366 = vrot.slane %v51, %v365
    %v367 = vadd.f32 %v362, %v366
    %v368 = vmax.f32 %v367, 0.0
    %v369 = vpack.c.bf16 %v368, %v368
    %v370 = vld [vmem:[%s3] sm:$0xf]
    %v371 = vld [vmem:[%s3 + $0x4] sm:$0xf]
    %v372 = vld [vmem:[%s3 + $0x8] sm:$0xf]
    %v373 = vld [vmem:[%s3 + $0xc] sm:$0xf]
    %v374 = vld [vmem:[%s3 + $0x10] sm:$0xf]
    %v375 = vld [vmem:[%s3 + $0x14] sm:$0xf]
    %v376 = vld [vmem:[%s3 + $0x18] sm:$0xf]
    %v377 = vld [vmem:[%s3 + $0x1c] sm:$0xf]
    %v378 = vld [vmem:[%s3 + $0x20] sm:$0xf]
    %v379 = vld [vmem:[%s3 + $0x24] sm:$0xf]
    %v380 = vld [vmem:[%s3 + $0x28] sm:$0xf]
    %v381 = vld [vmem:[%s3 + $0x2c] sm:$0xf]
    %v382 = vld [vmem:[%s3 + $0x30] sm:$0xf]
    %v383 = vld [vmem:[%s3 + $0x34] sm:$0xf]
    %v384 = vld [vmem:[%s3 + $0x38] sm:$0xf]
    %v385 = vld [vmem:[%s3 + $0x3c] sm:$0xf]
    %v386 = vlaneseq
    %v387 = vshrl.u32 %v386, 7
    %v388 = vsub.s32 6, %v387
    %v389 = vrot.slane %v51, %v388
    %v406 = vunpack.c.l.b16 %v370
    %v407 = vunpack.c.l.b16 %v371
    %v408 = vunpack.c.l.b16 %v372
    %v409 = vunpack.c.l.b16 %v373
    %v410 = vunpack.c.l.b16 %v374
    %v411 = vunpack.c.l.b16 %v375
    %v412 = vunpack.c.l.b16 %v376
    %v413 = vunpack.c.l.b16 %v377
    %v414 = vunpack.c.l.b16 %v378
    %v415 = vunpack.c.l.b16 %v379
    %v416 = vunpack.c.l.b16 %v380
    %v417 = vunpack.c.l.b16 %v381
    %v418 = vunpack.c.l.b16 %v382
    %v419 = vunpack.c.l.b16 %v383
    %v420 = vunpack.c.l.b16 %v384
    %v421 = vunpack.c.l.b16 %v385
    %v422 = vpack.c.b16 %v407, %v406
    %v423 = vpack.c.b16 %v409, %v408
    %v424 = vpack.c.b16 %v411, %v410
    %v425 = vpack.c.b16 %v413, %v412
    %v426 = vpack.c.b16 %v415, %v414
    %v427 = vpack.c.b16 %v417, %v416
    %v428 = vpack.c.b16 %v419, %v418
    %v429 = vpack.c.b16 %v421, %v420
    %438 = vmatprep.subr.bf16.mxu0 0
    %439 = vmatpush1.bf16.msra.mxu0 %v422
    %440 = vmatprep.subr.bf16.mxu0 0
    %441 = vmatpush1.bf16.msra.mxu0 %v423
    %442 = vmatprep.subr.bf16.mxu0 0
    %443 = vmatpush1.bf16.msra.mxu0 %v424
    %444 = vmatprep.subr.bf16.mxu0 0
    %445 = vmatpush1.bf16.msra.mxu0 %v425
    %446 = vmatprep.subr.bf16.mxu0 0
    %447 = vmatpush1.bf16.msra.mxu0 %v426
    %448 = vmatprep.subr.bf16.mxu0 0
    %449 = vmatpush1.bf16.msra.mxu0 %v427
    %450 = vmatprep.subr.bf16.mxu0 0
    %451 = vmatpush1.bf16.msra.mxu0 %v428
    %452 = vmatprep.subr.bf16.mxu0 0
    %453 = vmatpush1.bf16.msra.mxu0 %v429
    %454 = vmatprep.subr.bf16.mxu0 0
    %455 = vmatpush1.bf16.msra.mxu0 0
    %456 = vmatprep.subr.bf16.mxu0 0
    %457 = vmatpush1.bf16.msra.mxu0 0
    %458 = vmatprep.subr.bf16.mxu0 0
    %459 = vmatpush1.bf16.msra.mxu0 0
    %460 = vmatprep.subr.bf16.mxu0 0
    %461 = vmatpush1.bf16.msra.mxu0 0
    %462 = vmatprep.subr.bf16.mxu0 0
    %463 = vmatpush1.bf16.msra.mxu0 0
    %464 = vmatprep.subr.bf16.mxu0 0
    %465 = vmatpush1.bf16.msra.mxu0 0
    %466 = vmatprep.subr.bf16.mxu0 0
    %467 = vmatpush1.bf16.msra.mxu0 0
    %468 = vmatprep.subr.bf16.mxu0 0
    %469 = vmatpush1.bf16.msra.mxu0 0
    %470 = vmatprep.mubr.bf16.mxu0 0
    %471 = vmatmul.mubr.bf16.gmra.mrb[0].mxu0 %v369
    %v472 = vpop.f32.mrb[0].mxu0
    %v473 = vadd.f32 %v389, %v472
    %v474 = vpop.f32.mrb[0].mxu0
    %v475 = vpop.f32.mrb[0].mxu0
    %v476 = vpop.f32.mrb[0].mxu0
    %477 = vdwg.mxu0
    %vm478 = vcmask 523264
    %v479 = vsel %vm478, %v473, 0.0
    %480 = vadd.xlane.f32.xlu0 %v479
    %v481 = vpop.xlane.xlu0 %480
    %v482 = vrcp.pop 64.0
    %v483 = vmul.f32 %v481, %v482
    %v484 = vsub.f32 %v473, %v483
    %v485 = vmul.f32 %v484, %v484
    %v486 = vsel %vm478, %v485, 0.0
    %487 = vadd.xlane.f32.xlu0 %v486
    %v488 = vpop.xlane.xlu0 %487
    %v489 = vmul.f32 %v488, %v482
    %v490 = vadd.f32 %v489, 1e-05
    %v491 = vrsqrt.pop %v490
    %v492 = vmul.f32 %v484, %v491
    %v493 = vlaneseq
    %v494 = vshrl.u32 %v493, 7
    %v495 = vsub.s32 7, %v494
    %v496 = vrot.slane %v51, %v495
    %v497 = vmul.f32 %v492, %v496
    %v498 = vlaneseq
    %v499 = vshrl.u32 %v498, 7
    %v500 = vsub.s32 0, %v499
    %v501 = vrot.slane %v53, %v500
    %v502 = vadd.f32 %v497, %v501
    %v503 = vmax.f32 %v502, 0.0
    %v504 = vpack.c.bf16 %v503, %v503
    %v505 = vld [vmem:[%s4] sm:$0xf]
    %v506 = vld [vmem:[%s4 + $0x4] sm:$0xf]
    %v507 = vld [vmem:[%s4 + $0x8] sm:$0xf]
    %v508 = vld [vmem:[%s4 + $0xc] sm:$0xf]
    %v509 = vld [vmem:[%s4 + $0x10] sm:$0xf]
    %v510 = vld [vmem:[%s4 + $0x14] sm:$0xf]
    %v511 = vld [vmem:[%s4 + $0x18] sm:$0xf]
    %v512 = vld [vmem:[%s4 + $0x1c] sm:$0xf]
    %v521 = vunpack.c.l.b16 %v505
    %v522 = vunpack.c.l.b16 %v506
    %v523 = vunpack.c.l.b16 %v507
    %v524 = vunpack.c.l.b16 %v508
    %v525 = vunpack.c.l.b16 %v509
    %v526 = vunpack.c.l.b16 %v510
    %v527 = vunpack.c.l.b16 %v511
    %v528 = vunpack.c.l.b16 %v512
    %v529 = vpack.c.b16 %v522, %v521
    %v530 = vpack.c.b16 %v524, %v523
    %v531 = vpack.c.b16 %v526, %v525
    %v532 = vpack.c.b16 %v528, %v527
    %v538 = vsel %vm478, %v504, 0
    %540 = vmatprep.subr.bf16.mxu0 0
    %541 = vmatpush1.bf16.msra.mxu0 %v529
    %542 = vmatprep.subr.bf16.mxu0 0
    %543 = vmatpush1.bf16.msra.mxu0 %v530
    %544 = vmatprep.subr.bf16.mxu0 0
    %545 = vmatpush1.bf16.msra.mxu0 %v531
    %546 = vmatprep.subr.bf16.mxu0 0
    %547 = vmatpush1.bf16.msra.mxu0 %v532
    %548 = vmatprep.subr.bf16.mxu0 0
    %549 = vmatpush1.bf16.msra.mxu0 0
    %550 = vmatprep.subr.bf16.mxu0 0
    %551 = vmatpush1.bf16.msra.mxu0 0
    %552 = vmatprep.subr.bf16.mxu0 0
    %553 = vmatpush1.bf16.msra.mxu0 0
    %554 = vmatprep.subr.bf16.mxu0 0
    %555 = vmatpush1.bf16.msra.mxu0 0
    %556 = vmatprep.subr.bf16.mxu0 0
    %557 = vmatpush1.bf16.msra.mxu0 0
    %558 = vmatprep.subr.bf16.mxu0 0
    %559 = vmatpush1.bf16.msra.mxu0 0
    %560 = vmatprep.subr.bf16.mxu0 0
    %561 = vmatpush1.bf16.msra.mxu0 0
    %562 = vmatprep.subr.bf16.mxu0 0
    %563 = vmatpush1.bf16.msra.mxu0 0
    %564 = vmatprep.subr.bf16.mxu0 0
    %565 = vmatpush1.bf16.msra.mxu0 0
    %566 = vmatprep.subr.bf16.mxu0 0
    %567 = vmatpush1.bf16.msra.mxu0 0
    %568 = vmatprep.subr.bf16.mxu0 0
    %569 = vmatpush1.bf16.msra.mxu0 0
    %570 = vmatprep.subr.bf16.mxu0 0
    %571 = vmatpush1.bf16.msra.mxu0 0
    %572 = vmatprep.mubr.bf16.mxu0 0
    %573 = vmatmul.mubr.bf16.gmra.mrb[0].mxu0 %v538
    %v574 = vpop.f32.mrb[0].mxu0
    %v575 = vadd.f32 0.0, %v574
    %v576 = vpop.f32.mrb[0].mxu0
    %v577 = vpop.f32.mrb[0].mxu0
    %v578 = vpop.f32.mrb[0].mxu0
    %579 = vdwg.mxu0
    %v580 = vlaneseq
    %v581 = vshrl.u32 %v580, 7
    %v582 = vsub.s32 1, %v581
    %v583 = vrot.slane %v53, %v582
    %v584 = vadd.f32 %v575, %v583
    %vm585 = vcmask 39936
    %586 = vst.msk [vmem:[#allocation7] sm:$0xff] %vm585, %v584
    // Predicated region
    $region34: #{tpu_custom_call.1} parent=1 // pred_check
      _
    $region35: #{tpu_custom_call.1} parent=1 // pred_check_branch
      %588 = sbr.rel (0) target = $region37
    $region36: #{tpu_custom_call.1} parent=1 // pred_region
      %s590 = ssub.s32 128, 128
      %591 = vsyncadd [#allocation4], %s590
      %s593 = sshll.u32 [#allocation7], 4
      %s594 = int_to_ptr.vmem [resolvable:$true] %s593
      %596 = dma.vmem_to_hbm [thread:$0]  %s594, 128, %s6, [#allocation4]
    $region37: #{tpu_custom_call.1} parent=1 // pred_fallthru
      _
    // Predicated region
    $region38: #{tpu_custom_call.1} parent=1 // pred_check
      _
    $region39: #{tpu_custom_call.1} parent=1 // pred_check_branch
      %598 = sbr.rel (0) target = $region41
    $region40: #{tpu_custom_call.1} parent=1 // pred_region
      %599 = dma.done [#allocation4], 128
    $region41: #{tpu_custom_call.1} parent=1 // pred_fallthru
      _
    %600 = vsyncpa [#allocation3], 1
    %601 = vsyncpa [#allocation6], 1
    %602 = vsyncpa [#allocation4], 1

</llo_original>
